<compile_context>
chip_gen: v7x
topology: tpu7x:2x2x1
jax: 0.10.0
libtpu: 0.0.40
codegen_flags: <defaults>
</compile_context>

<pallas_src>
import math

import jax
import jax.numpy as jnp
from jax.experimental import pallas as pl
from jax.experimental.pallas import tpu as pltpu


def _rbf_kernel(d_ref, emat_ref, off_ref, coeff_ref, out_ref):
    # d_exp[r, p*n_rbf + j] = d[r, p]  — 0/1 expansion matmul on the (idle) MXU,
    # keeps the whole lane-dense row in vregs (no scratch round-trip).
    d_exp = jnp.dot(d_ref[...], emat_ref[...],
                    preferred_element_type=jnp.float32)        # (tile_r, L)
    diff = d_exp - off_ref[...]                                 # (1, L) broadcast
    # One dense multiply + exp and a single unmasked lane-dense store.
    out_ref[...] = jnp.exp(coeff_ref[...] * (diff * diff)).astype(out_ref.dtype)


def rbf_layer(d: jax.Array, offsets: jax.Array, coeff: jax.Array, *,
              out_dtype=jnp.float32,
              target_tile_bytes: int = 2 * 1024 * 1024) -> jax.Array:
    """exp(coeff * (d[..., None] - offsets)**2) -> d.shape + (n_rbf,)."""
    n_rbf = offsets.shape[0]
    lead_shape = d.shape
    M = math.prod(lead_shape)

    # Lane packing: `pack` consecutive distances share one output row so each
    # row is an exact multiple of 128 lanes (dense stores) for any n_rbf.
    pack_base = 128 // math.gcd(n_rbf, 128)
    pack = pack_base * max(1, -(-8 // pack_base))   # >= 8 -> clean MXU K dim
    L = n_rbf * pack                                 # row width, multiple of 128
    # TODO(synk): for pathological n_rbf (large prime), the resident (pack, L)
    # expansion matrix grows to a few MiB; acceptable, but could be bf16.

    R = -(-M // pack)                                # packed rows needed
    R8 = -(-R // 8) * 8

    # Row tiling: ~2 MiB output tile amortizes per-step overhead; keep >=2 grid
    # steps when possible so v7x's two TensorCores both get work.
    out_row_bytes = L * jnp.dtype(out_dtype).itemsize
    target_rows = max(8, (target_tile_bytes // out_row_bytes) // 8 * 8)
    tile_r = min(target_rows, R8)
    if tile_r == R8 and R8 >= 16:
        tile_r = max(8, (R8 // 2) // 8 * 8)
    R_pad = -(-R // tile_r) * tile_r
    M_pad = R_pad * pack

    d_flat = d.reshape(-1).astype(jnp.float32)
    if M_pad != M:
        # TODO(synk): for large ragged M, mask the last tile in-kernel instead;
        # the out[:M] slice below re-copies the dominant array once.
        d_flat = jnp.pad(d_flat, (0, M_pad - M))
    d_packed = d_flat.reshape(R_pad, pack)

    offsets_f = offsets.astype(jnp.float32)
    coeff_f = jnp.broadcast_to(jnp.asarray(coeff, jnp.float32).reshape(-1), (n_rbf,))
    off_row = jnp.tile(offsets_f, pack).reshape(1, L)     # off_row[p*n_rbf+j] = offsets[j]
    coeff_row = jnp.tile(coeff_f, pack).reshape(1, L)

    # 0/1 expansion matrix: emat[p, p*n_rbf + j] = 1.
    emat = (jnp.arange(pack, dtype=jnp.int32)[:, None]
            == (jnp.arange(L, dtype=jnp.int32)[None, :] // n_rbf)).astype(jnp.float32)

    out = pl.pallas_call(
        _rbf_kernel,
        out_shape=jax.ShapeDtypeStruct((R_pad, L), out_dtype),
        grid_spec=pltpu.PrefetchScalarGridSpec(
            num_scalar_prefetch=0,
            grid=(R_pad // tile_r,),
            in_specs=[
                pl.BlockSpec((tile_r, pack), lambda i: (i, 0)),   # distances
                pl.BlockSpec((pack, L), lambda i: (0, 0)),        # expand mat (resident)
                pl.BlockSpec((1, L), lambda i: (0, 0)),           # offsets   (resident)
                pl.BlockSpec((1, L), lambda i: (0, 0)),           # coeff     (resident)
            ],
            out_specs=pl.BlockSpec((tile_r, L), lambda i: (i, 0)),
        ),
        compiler_params=pltpu.CompilerParams(
            dimension_semantics=("parallel",),
            vmem_limit_bytes=32 * 1024 * 1024),
    )(d_packed, emat, off_row, coeff_row)

    # (R_pad, pack*n_rbf) row-major == (R_pad*pack, n_rbf) row-major: free reshape.
    out = out.reshape(M_pad, n_rbf)
    if M_pad != M:
        out = out[:M]
    return out.reshape(*lead_shape, n_rbf)


def make_rbf_params(n_rbf: int, cutoff: float):
    """Deterministic parameter setup, matching RBFLayer.__init__."""
    offsets = jnp.linspace(0.0, cutoff, n_rbf, dtype=jnp.float32)
    width = jnp.full((n_rbf,), cutoff / n_rbf, dtype=jnp.float32)
    coeff = -0.5 / (width ** 2)
    return offsets, coeff


if __name__ == "__main__":
    n_rbf = 32
    cutoff = 5.0
    B, N = 2, 64

    key = jax.random.PRNGKey(0)
    d = jax.random.uniform(key, (B, N), dtype=jnp.float32,
                           minval=0.0, maxval=cutoff)

    offsets, coeff = make_rbf_params(n_rbf, cutoff)

    out = rbf_layer(d, offsets, coeff)
    out = jax.block_until_ready(out)

    # Reference check (plain JAX) — same math as the PyTorch forward.
    ref = jnp.exp(coeff[None, None, :] * (d[..., None] - offsets[None, None, :]) ** 2)
    assert out.shape == (B, N, n_rbf)
    assert jnp.allclose(out, ref, atol=1e-5, rtol=1e-5)

    print("KERNEL_OK")
</pallas_src>

<mosaic_0001>
module attributes {stable_mosaic.version = 11 : i64} {
  func.func @_rbf_kernel(%arg0: i32, %arg1: memref<8x8xf32, #tpu.memory_space<vmem>>, %arg2: memref<8x256xf32, #tpu.memory_space<vmem>>, %arg3: memref<1x256xf32, #tpu.memory_space<vmem>>, %arg4: memref<1x256xf32, #tpu.memory_space<vmem>>, %arg5: memref<8x256xf32, #tpu.memory_space<vmem>>) attributes {dimension_semantics = [#tpu.dimension_semantics<parallel>], iteration_bounds = array<i64: 2>, scalar_prefetch = 0 : i64, scratch_operands = 0 : i64, tpu.core_type = #tpu.core_type<tc>, window_params = [{transform_indices = @transform_0, window_bounds = array<i64: 8, 8>}, {pipeline_mode = #tpu.pipeline_mode<synchronous>, transform_indices = @transform_1, window_bounds = array<i64: 8, 256>}, {pipeline_mode = #tpu.pipeline_mode<synchronous>, transform_indices = @transform_2, window_bounds = array<i64: 1, 256>}, {pipeline_mode = #tpu.pipeline_mode<synchronous>, transform_indices = @transform_3, window_bounds = array<i64: 1, 256>}, {transform_indices = @transform_4, window_bounds = array<i64: 8, 256>}]} {
    %c0 = arith.constant 0 : index
    %c0_0 = arith.constant 0 : index
    %0 = vector.load %arg1[%c0, %c0_0] : memref<8x8xf32, #tpu.memory_space<vmem>>, vector<8x8xf32>
    %c0_1 = arith.constant 0 : index
    %c0_2 = arith.constant 0 : index
    %1 = vector.load %arg2[%c0_1, %c0_2] : memref<8x256xf32, #tpu.memory_space<vmem>>, vector<8x256xf32>
    %cst = arith.constant dense<0.000000e+00> : vector<8x256xf32>
    %2 = tpu.matmul %0, %1, %cst {dimension_numbers = #tpu.dot_dimension_numbers<[1], [0], [0], [1], [0, 0, 1, 1], [], []>} : vector<8x8xf32>, vector<8x256xf32>, vector<8x256xf32> -> vector<8x256xf32>
    %c0_3 = arith.constant 0 : index
    %c0_4 = arith.constant 0 : index
    %3 = vector.load %arg3[%c0_3, %c0_4] : memref<1x256xf32, #tpu.memory_space<vmem>>, vector<1x256xf32>
    %4 = vector.broadcast %3 : vector<1x256xf32> to vector<8x256xf32>
    %5 = arith.subf %2, %4 : vector<8x256xf32>
    %c0_5 = arith.constant 0 : index
    %c0_6 = arith.constant 0 : index
    %6 = vector.load %arg4[%c0_5, %c0_6] : memref<1x256xf32, #tpu.memory_space<vmem>>, vector<1x256xf32>
    %7 = arith.mulf %5, %5 : vector<8x256xf32>
    %8 = vector.broadcast %6 : vector<1x256xf32> to vector<8x256xf32>
    %9 = arith.mulf %8, %7 : vector<8x256xf32>
    %10 = math.exp %9 : vector<8x256xf32>
    %c0_7 = arith.constant 0 : index
    %c0_8 = arith.constant 0 : index
    %11 = vector.load %arg5[%c0_7, %c0_8] : memref<8x256xf32, #tpu.memory_space<vmem>>, vector<8x256xf32>
    tpu.vector_store %arg5[%c0_7, %c0_8], %10 {strides = array<i32>} : memref<8x256xf32, #tpu.memory_space<vmem>>, vector<8x256xf32>,
    return
  }
  func.func @transform_0(%arg0: i32) -> (i32, i32) {
    %c0_i32 = arith.constant 0 : i32
    %c0_i32_0 = arith.constant 0 : i32
    return %arg0, %c0_i32 : i32, i32
  }
  func.func @transform_1(%arg0: i32) -> (i32, i32) {
    %c0_i32 = arith.constant 0 : i32
    %c0_i32_0 = arith.constant 0 : i32
    %c0_i32_1 = arith.constant 0 : i32
    return %c0_i32, %c0_i32_0 : i32, i32
  }
  func.func @transform_2(%arg0: i32) -> (i32, i32) {
    %c0_i32 = arith.constant 0 : i32
    %c0_i32_0 = arith.constant 0 : i32
    %c0_i32_1 = arith.constant 0 : i32
    return %c0_i32, %c0_i32_0 : i32, i32
  }
  func.func @transform_3(%arg0: i32) -> (i32, i32) {
    %c0_i32 = arith.constant 0 : i32
    %c0_i32_0 = arith.constant 0 : i32
    %c0_i32_1 = arith.constant 0 : i32
    return %c0_i32, %c0_i32_0 : i32, i32
  }
  func.func @transform_4(%arg0: i32) -> (i32, i32) {
    %c0_i32 = arith.constant 0 : i32
    %c0_i32_0 = arith.constant 0 : i32
    return %arg0, %c0_i32 : i32, i32
  }
}

</mosaic_0001>

<llo_original>
// kernel: tpu_custom_call.1
$region0: #{tpu_custom_call.1}
  #allocation0 [shape = 'u32[]', space=smem, size = 0x4, offset = 0x4, fixed_abs, tag = 'smem constant byte address 0x4 - core index']
  #allocation1 [shape = 'u32[144,128]{1,0:T(1,128)}', space=vmem, size = 0x12000, scoped, tag = 'internal scratch']
  %s0 = inlined_call_operand.vmem [shape: f32[16,8], index: 0, kind: input, shape index: {}]
  %s1 = inlined_call_operand.vmem [shape: f32[8,256], index: 1, kind: input, shape index: {}]
  %s2 = inlined_call_operand.vmem [shape: f32[1,256], index: 2, kind: input, shape index: {}]
  %s3 = inlined_call_operand.vmem [shape: f32[1,256], index: 3, kind: input, shape index: {}]
  %s4 = inlined_call_operand.hbm [shape: f32[16,256], index: 4, kind: output, shape index: {}]
  %s5 = sld [smem:[#allocation0]]
  $region49: #{tpu_custom_call.1} parent=0
    _
  %s7 = ssub.s32 1, %s5
  %s8 = scalar_select 0, %s7, %s5
  $region1: #{tpu_custom_call.1} parent=0
    #allocation2 [shape = 'u8[16384]{0}', space=vmem, size = 0x4000, scoped, tag = 'output window, operand 0']
    #allocation3 [shape = 's32[2]{0}', space=sflag, size = 0x8, scoped, tag = 'scoped memory for tpu_custom_call.1']
    %9 = vsyncpa [#allocation3], 0
    %s10 = scalar_lea.sflag [#allocation3], 1
    %11 = vsyncpa %s10, 0
    loop: start=0, step=1, limit=4
    $region2: #{tpu_custom_call.1} parent=1 // loop_pre_header
      _
    $region3: #{tpu_custom_call.1} parent=1 // loop_header
      %s13 = sphi 0, %s17
      %p14 = scmp.ge.s32.totalorder %s13, 4
      %s23 = sphi 0, %s25
      %s26 = sphi 0, %s23
      %s27 = sphi 0, %s26
      %s43 = sphi 0, %s27
      %s47 = sphi 0, %s47
      %s49 = sphi 0, %s47
      %s50 = sphi 0, %s49
      %s64 = sphi 0, %s50
      %s68 = sphi 0, %s68
      %s70 = sphi 0, %s68
      %s71 = sphi 0, %s70
      %s85 = sphi 0, %s71
      %s89 = sphi 0, %s89
      %s91 = sphi 0, %s89
      %s92 = sphi 0, %s91
      %s106 = sphi 0, %s92
      %s112 = sphi 0, %s114
      %s115 = sphi 0, %s112
      %s116 = sphi 0, %s115
      %s132 = sphi 0, %s116
    $region4: #{tpu_custom_call.1} parent=1 // loop_header_branch
      %16 = sbr.rel (%p14) target = $region8
    $region5: #{tpu_custom_call.1} parent=1 // loop_body
      %s18 = ssub.s32 %s13, 1
      %s19 = ssub.s32 %s13, 2
      %s20 = sadd.s32 %s13, 1
      %s21 = ssub.s32 %s13, %s20
      %p22 = scmp.eq.s32.totalorder %s21, 0
      %s24 = sadd.s32 %s23, 1
      %s25 = scalar_select %p22, %s23, %s24
      %p28 = pneg %p22
      %p29 = scmp.eq.s32.totalorder %s13, 1
      %p30 = por %p28, %p29
      %p31 = scmp.ne.s32.totalorder %s23, %s26
      %p32 = scmp.eq.s32.totalorder %s13, 0
      %p33 = por %p31, %p32
      %p34 = scmp.ne.s32.totalorder %s23, %s26
      %p35 = scmp.eq.s32.totalorder %s18, 1
      %p36 = por %p34, %p35
      %p37 = scmp.ne.s32.totalorder %s26, %s27
      %p38 = scmp.eq.s32.totalorder %s18, 0
      %p39 = por %p37, %p38
      %p40 = scmp.ne.s32.totalorder %s26, %s27
      %p41 = scmp.eq.s32.totalorder %s19, 1
      %p42 = por %p40, %p41
      %p44 = scmp.ne.s32.totalorder %s27, %s43
      %p45 = scmp.eq.s32.totalorder %s19, 0
      %p46 = por %p44, %p45
      %s48 = sadd.s32 %s47, 1
      %p51 = scmp.eq.s32.totalorder %s13, 1
      %p52 = scmp.ne.s32.totalorder %s47, %s49
      %p53 = scmp.eq.s32.totalorder %s13, 0
      %p54 = por %p52, %p53
      %p55 = scmp.ne.s32.totalorder %s47, %s49
      %p56 = scmp.eq.s32.totalorder %s18, 1
      %p57 = por %p55, %p56
      %p58 = scmp.ne.s32.totalorder %s49, %s50
      %p59 = scmp.eq.s32.totalorder %s18, 0
      %p60 = por %p58, %p59
      %p61 = scmp.ne.s32.totalorder %s49, %s50
      %p62 = scmp.eq.s32.totalorder %s19, 1
      %p63 = por %p61, %p62
      %p65 = scmp.ne.s32.totalorder %s50, %s64
      %p66 = scmp.eq.s32.totalorder %s19, 0
      %p67 = por %p65, %p66
      %s69 = sadd.s32 %s68, 1
      %p72 = scmp.eq.s32.totalorder %s13, 1
      %p73 = scmp.ne.s32.totalorder %s68, %s70
      %p74 = scmp.eq.s32.totalorder %s13, 0
      %p75 = por %p73, %p74
      %p76 = scmp.ne.s32.totalorder %s68, %s70
      %p77 = scmp.eq.s32.totalorder %s18, 1
      %p78 = por %p76, %p77
      %p79 = scmp.ne.s32.totalorder %s70, %s71
      %p80 = scmp.eq.s32.totalorder %s18, 0
      %p81 = por %p79, %p80
      %p82 = scmp.ne.s32.totalorder %s70, %s71
      %p83 = scmp.eq.s32.totalorder %s19, 1
      %p84 = por %p82, %p83
      %p86 = scmp.ne.s32.totalorder %s71, %s85
      %p87 = scmp.eq.s32.totalorder %s19, 0
      %p88 = por %p86, %p87
      %s90 = sadd.s32 %s89, 1
      %p93 = scmp.eq.s32.totalorder %s13, 1
      %p94 = scmp.ne.s32.totalorder %s89, %s91
      %p95 = scmp.eq.s32.totalorder %s13, 0
      %p96 = por %p94, %p95
      %p97 = scmp.ne.s32.totalorder %s89, %s91
      %p98 = scmp.eq.s32.totalorder %s18, 1
      %p99 = por %p97, %p98
      %p100 = scmp.ne.s32.totalorder %s91, %s92
      %p101 = scmp.eq.s32.totalorder %s18, 0
      %p102 = por %p100, %p101
      %p103 = scmp.ne.s32.totalorder %s91, %s92
      %p104 = scmp.eq.s32.totalorder %s19, 1
      %p105 = por %p103, %p104
      %p107 = scmp.ne.s32.totalorder %s92, %s106
      %p108 = scmp.eq.s32.totalorder %s19, 0
      %p109 = por %p107, %p108
      %s110 = ssub.s32 %s13, %s20
      %p111 = scmp.eq.s32.totalorder %s110, 0
      %s113 = sadd.s32 %s112, 1
      %s114 = scalar_select %p111, %s112, %s113
      %p117 = pneg %p111
      %p118 = scmp.eq.s32.totalorder %s13, 1
      %p119 = por %p117, %p118
      %p120 = scmp.ne.s32.totalorder %s112, %s115
      %p121 = scmp.eq.s32.totalorder %s13, 0
      %p122 = por %p120, %p121
      %p123 = scmp.ne.s32.totalorder %s112, %s115
      %p124 = scmp.eq.s32.totalorder %s18, 1
      %p125 = por %p123, %p124
      %p126 = scmp.ne.s32.totalorder %s115, %s116
      %p127 = scmp.eq.s32.totalorder %s18, 0
      %p128 = por %p126, %p127
      %p129 = scmp.ne.s32.totalorder %s115, %s116
      %p130 = scmp.eq.s32.totalorder %s19, 1
      %p131 = por %p129, %p130
      %p133 = scmp.ne.s32.totalorder %s116, %s132
      %p134 = scmp.eq.s32.totalorder %s19, 0
      %p135 = por %p133, %p134
      %p136 = scmp.le.s32.totalorder 1, %s13
      %p137 = scmp.lt.s32.totalorder %s13, 3
      %p138 = pnand %p136, %p137
      %p139 = pneg %p138
      // Predicated region
      $region9: #{tpu_custom_call.1} parent=5 // pred_check
        _
      $region10: #{tpu_custom_call.1} parent=5 // pred_check_branch
        %141 = sbr.rel (%p138) target = $region12
      $region11: #{tpu_custom_call.1} parent=5 // pred_region
        %s142 = ssub.s32 %s13, 1
        // Predicated region
        $region13: #{tpu_custom_call.1} parent=11 // pred_check
          %p143 = pneg %p60
        $region14: #{tpu_custom_call.1} parent=11 // pred_check_branch
          %145 = sbr.rel (%p143) target = $region16
        $region15: #{tpu_custom_call.1} parent=11 // pred_region
          _
        $region16: #{tpu_custom_call.1} parent=11 // pred_fallthru
          _
        // Predicated region
        $region17: #{tpu_custom_call.1} parent=11 // pred_check
          %p146 = pneg %p81
        $region18: #{tpu_custom_call.1} parent=11 // pred_check_branch
          %148 = sbr.rel (%p146) target = $region20
        $region19: #{tpu_custom_call.1} parent=11 // pred_region
          _
        $region20: #{tpu_custom_call.1} parent=11 // pred_fallthru
          _
        // Predicated region
        $region21: #{tpu_custom_call.1} parent=11 // pred_check
          %p149 = pneg %p102
        $region22: #{tpu_custom_call.1} parent=11 // pred_check_branch
          %151 = sbr.rel (%p149) target = $region24
        $region23: #{tpu_custom_call.1} parent=11 // pred_region
          _
        $region24: #{tpu_custom_call.1} parent=11 // pred_fallthru
          _
      $region12: #{tpu_custom_call.1} parent=5 // pred_fallthru
        _
      %p152 = scmp.lt.s32.totalorder %s13, 2
      // Predicated region
      $region25: #{tpu_custom_call.1} parent=5 // pred_check
        %p153 = pneg %p152
      $region26: #{tpu_custom_call.1} parent=5 // pred_check_branch
        %155 = sbr.rel (%p153) target = $region28
      $region27: #{tpu_custom_call.1} parent=5 // pred_region
        // Predicated region
        $region29: #{tpu_custom_call.1} parent=27 // pred_check
          %p156 = pneg %p33
        $region30: #{tpu_custom_call.1} parent=27 // pred_check_branch
          %158 = sbr.rel (%p156) target = $region32
        $region31: #{tpu_custom_call.1} parent=27 // pred_region
          %p159 = scmp.lt.s32.totalorder %s13, 1
          %s160 = scalar_select %p159, %s13, 1
          %s161 = smul.addr %s160, 8
          %s162 = scalar_lea.vmem %s0, %s161
        $region32: #{tpu_custom_call.1} parent=27 // pred_fallthru
          _
      $region28: #{tpu_custom_call.1} parent=5 // pred_fallthru
        _
      %p163 = scmp.le.s32.totalorder 1, %s13
      %p164 = scmp.lt.s32.totalorder %s13, 3
      %p165 = pnand %p163, %p164
      %p166 = pneg %p165
      // Predicated region
      $region33: #{tpu_custom_call.1} parent=5 // pred_check
        _
      $region34: #{tpu_custom_call.1} parent=5 // pred_check_branch
        %168 = sbr.rel (%p165) target = $region36
      $region35: #{tpu_custom_call.1} parent=5 // pred_region
        %s169 = ssub.s32 %s13, 1
        %p170 = scmp.lt.s32.totalorder %s18, 1
        %s171 = scalar_select %p170, %s18, 1
        %s172 = smul.addr %s171, 8
        %s173 = scalar_lea.vmem %s0, %s172
        %p174 = pneg %p39
        %p175 = pneg %p36
        %p176 = pneg %p60
        %p177 = pneg %p57
        %p178 = pneg %p81
        %p179 = pneg %p78
        %p180 = pneg %p102
        %p181 = pneg %p99
        %p182 = pneg %p128
        %p183 = pneg %p125
        %s184 = sand.u32 %s115, 1
        %s185 = scalar_lea.sflag [#allocation3], %s184
        %s186 = sand.u32 %s115, 1
        %s187 = smul.addr %s186, 16
        %s188 = scalar_lea.vmem [#allocation2], %s187
        %p189 = scmp.lt.s32.totalorder %s18, 1
        %s190 = scalar_select %p189, %s18, 1
        %s191 = smul.addr %s190, 8
        %s192 = scalar_lea.vmem %s0, %s191
        %v193 = vld [vmem:[%s192] sm:$0xff]
        %v194 = vld [vmem:[%s1] sm:$0xff]
        %v195 = vld [vmem:[%s1 + $0x8] sm:$0xff]
        %vm196 = vcmask 64512
        %v198 = vsel %vm196, %v193, 0
        %200 = vmatprep.subr.mxu0 %v195
        %201 = vmatpush1.msra.mxu0 %v194
        %202 = vmatprep.subr.mxu0 0.0
        %203 = vmatpush1.msra.mxu0 0.0
        %204 = vmatprep.subr.mxu0 0.0
        %205 = vmatpush1.msra.mxu0 0.0
        %206 = vmatprep.subr.mxu0 0.0
        %207 = vmatpush1.msra.mxu0 0.0
        %208 = vmatprep.subr.mxu0 0.0
        %209 = vmatpush1.msra.mxu0 0.0
        %210 = vmatprep.subr.mxu0 0.0
        %211 = vmatpush1.msra.mxu0 0.0
        %212 = vmatprep.subr.mxu0 0.0
        %213 = vmatpush1.msra.mxu0 0.0
        %214 = vmatprep.subr.mxu0 0.0
        %215 = vmatpush1.msra.mxu0 0.0
        %216 = vmatprep.subr.mxu0 0.0
        %217 = vmatpush1.msra.mxu0 0.0
        %218 = vmatprep.subr.mxu0 0.0
        %219 = vmatpush1.msra.mxu0 0.0
        %220 = vmatprep.subr.mxu0 0.0
        %221 = vmatpush1.msra.mxu0 0.0
        %222 = vmatprep.subr.mxu0 0.0
        %223 = vmatpush1.msra.mxu0 0.0
        %224 = vmatprep.subr.mxu0 0.0
        %225 = vmatpush1.msra.mxu0 0.0
        %226 = vmatprep.subr.mxu0 0.0
        %227 = vmatpush1.msra.mxu0 0.0
        %228 = vmatprep.subr.mxu0 0.0
        %229 = vmatpush1.msra.mxu0 0.0
        %230 = vmatprep.subr.mxu0 0.0
        %231 = vmatpush1.msra.mxu0 0.0
        %232 = vmatprep.subr.mxu0 0.0
        %233 = vmatpush1.msra.mxu0 0.0
        %234 = vmatprep.subr.mxu0 0.0
        %235 = vmatpush1.msra.mxu0 0.0
        %236 = vmatprep.subr.mxu0 0.0
        %237 = vmatpush1.msra.mxu0 0.0
        %238 = vmatprep.subr.mxu0 0.0
        %239 = vmatpush1.msra.mxu0 0.0
        %240 = vmatprep.subr.mxu0 0.0
        %241 = vmatpush1.msra.mxu0 0.0
        %242 = vmatprep.subr.mxu0 0.0
        %243 = vmatpush1.msra.mxu0 0.0
        %244 = vmatprep.subr.mxu0 0.0
        %245 = vmatpush1.msra.mxu0 0.0
        %246 = vmatprep.subr.mxu0 0.0
        %247 = vmatpush1.msra.mxu0 0.0
        %248 = vmatprep.subr.mxu0 0.0
        %249 = vmatpush1.msra.mxu0 0.0
        %250 = vmatprep.subr.mxu0 0.0
        %251 = vmatpush1.msra.mxu0 0.0
        %252 = vmatprep.subr.mxu0 0.0
        %253 = vmatpush1.msra.mxu0 0.0
        %254 = vmatprep.subr.mxu0 0.0
        %255 = vmatpush1.msra.mxu0 0.0
        %256 = vmatprep.subr.mxu0 0.0
        %257 = vmatpush1.msra.mxu0 0.0
        %258 = vmatprep.subr.mxu0 0.0
        %259 = vmatpush1.msra.mxu0 0.0
        %260 = vmatprep.subr.mxu0 0.0
        %261 = vmatpush1.msra.mxu0 0.0
        %262 = vmatprep.subr.mxu0 0.0
        %263 = vmatpush1.msra.mxu0 0.0
        %264 = vmatprep.mubr.f32.mxu0 0.0
        %265 = vmatmul.mubr.f32.gmra.mrb[0].mxu0 %v198
        %v266 = vpop.f32.mrb[0].mxu0
        %v267 = vadd.f32 0.0, %v266
        %v268 = vpop.f32.mrb[0].mxu0
        %v269 = vadd.f32 0.0, %v268
        %270 = vdwg.mxu0
        %v271 = vld [vmem:[%s2] sm:$0x3]
        %v273 = vlaneseq
        %v274 = vshrl.u32 %v273, 7
        %v275 = vsub.s32 0, %v274
        %v276 = vrot.slane %v271, %v275
        %v277 = vlaneseq
        %v278 = vshrl.u32 %v277, 7
        %v279 = vsub.s32 1, %v278
        %v280 = vrot.slane %v271, %v279
        %v283 = vsub.f32 %v267, %v276
        %v284 = vsub.f32 %v269, %v280
        %v285 = vld [vmem:[%s3] sm:$0x3]
        %v286 = vmul.f32 %v283, %v283
        %v287 = vmul.f32 %v284, %v284
        %v289 = vlaneseq
        %v290 = vshrl.u32 %v289, 7
        %v291 = vsub.s32 0, %v290
        %v292 = vrot.slane %v285, %v291
        %v293 = vlaneseq
        %v294 = vshrl.u32 %v293, 7
        %v295 = vsub.s32 1, %v294
        %v296 = vrot.slane %v285, %v295
        %v299 = vmul.f32 %v292, %v286
        %v300 = vmul.f32 %v296, %v287
        %v301 = vmul.f32 %v299, 1.442695
        %v302 = vpow.pop %v301
        %v303 = vmul.f32 %v300, 1.442695
        %v304 = vpow.pop %v303
        %305 = vst [vmem:[%s188] sm:$0xff] %v302
        %306 = vst [vmem:[%s188 + $0x8] sm:$0xff] %v304
        %s307 = sand.u32 %s115, 1
        %s308 = scalar_lea.sflag [#allocation3], %s307
        %s309 = sand.u32 %s115, 1
        %s310 = smul.addr %s309, 16
        %s311 = scalar_lea.vmem [#allocation2], %s310
        // Predicated region
        $region37: #{tpu_custom_call.1} parent=35 // pred_check
          %p312 = pneg %p125
        $region38: #{tpu_custom_call.1} parent=35 // pred_check_branch
          %314 = sbr.rel (%p312) target = $region40
        $region39: #{tpu_custom_call.1} parent=35 // pred_region
          %s316 = ssub.s32 256, 256
          %317 = vsyncadd %s308, %s316
          %s318 = smul.addr %s18, 2
          %s319 = smul.addr %s318, 128
          %s320 = scalar_lea.hbm %s4, %s319
          %s322 = sshll.u32 %s311, 4
          %s323 = int_to_ptr.vmem [resolvable:$true] %s322
          %325 = dma.vmem_to_hbm [thread:$0]  %s323, 256, %s320, %s308
        $region40: #{tpu_custom_call.1} parent=35 // pred_fallthru
          _
      $region36: #{tpu_custom_call.1} parent=5 // pred_fallthru
        _
      %p326 = scmp.le.s32.totalorder 2, %s13
      // Predicated region
      $region41: #{tpu_custom_call.1} parent=5 // pred_check
        %p327 = pneg %p326
      $region42: #{tpu_custom_call.1} parent=5 // pred_check_branch
        %329 = sbr.rel (%p327) target = $region44
      $region43: #{tpu_custom_call.1} parent=5 // pred_region
        %s330 = ssub.s32 %s13, 2
        // Predicated region
        $region45: #{tpu_custom_call.1} parent=43 // pred_check
          %p331 = pneg %p131
        $region46: #{tpu_custom_call.1} parent=43 // pred_check_branch
          %333 = sbr.rel (%p331) target = $region48
        $region47: #{tpu_custom_call.1} parent=43 // pred_region
          %s334 = sand.u32 %s116, 1
          %s335 = scalar_lea.sflag [#allocation3], %s334
          %s336 = sand.u32 %s116, 1
          %s337 = smul.addr %s336, 16
          %s338 = scalar_lea.vmem [#allocation2], %s337
          %339 = dma.done %s335, 256
        $region48: #{tpu_custom_call.1} parent=43 // pred_fallthru
          _
      $region44: #{tpu_custom_call.1} parent=5 // pred_fallthru
        _
    $region6: #{tpu_custom_call.1} parent=1 // loop_footer
      %s17 = sadd.s32 1, %s13
    $region7: #{tpu_custom_call.1} parent=1 // loop_footer_branch
      %12 = sbr.rel target = $region3
    $region8: #{tpu_custom_call.1} parent=1 // loop_exit
      _
    %340 = vsyncpa [#allocation3], 1
    %s341 = scalar_lea.sflag [#allocation3], 1
    %342 = vsyncpa %s341, 1

</llo_original>
